<compile_context>
chip_gen: v7x
topology: tpu7x:2x2x1
jax: 0.10.0
libtpu: 0.0.40
codegen_flags: <defaults>
</compile_context>

<pallas_src>
import functools

import numpy as np
import jax
import jax.numpy as jnp
from jax.experimental import pallas as pl
from jax.experimental.pallas import tpu as pltpu


def _leaky_relu(x, slope=0.01):
    return jnp.where(x >= 0, x, slope * x)


def _naive_mlp_kernel(x_ref, *refs, hidden_dims):
    """One row-block of the MLP.

    refs = (Wstack_0 .. Wstack_L, b_1 .. b_L, b_out, out_ref)
      Wstack_i (i < L): bf16 (d_in_i, hidden_dims[i] + out_dim)
                        = [W_layer_i | W_out_slab_i]
      Wstack_L        : bf16 (hidden_dims[-1] (or z_dim if L==0), out_dim)
    """
    L = len(hidden_dims)
    w_refs = refs[:L + 1]
    b_refs = refs[L + 1:2 * L + 2]      # b_1..b_L, b_out  (f32)
    out_ref = refs[2 * L + 2]

    h = x_ref[...]                      # (TM, z_dim), f32
    acc = None                          # running out_fc0 contribution, f32

    for i in range(L):
        # One stacked matmul: next-layer preactivation + out_fc0 slab contribution.
        res = jnp.dot(h.astype(jnp.bfloat16), w_refs[i][...],
                      preferred_element_type=jnp.float32)   # (TM, h_i + out_dim)
        hdim = hidden_dims[i]
        z = res[:, :hdim] + b_refs[i][...]                   # layer preactivation
        contrib = res[:, hdim:]                              # out_fc0 slab product
        acc = contrib if acc is None else acc + contrib
        h = _leaky_relu(z)                                   # f32 on the VPU

    # Last activation only feeds out_fc0.
    res = jnp.dot(h.astype(jnp.bfloat16), w_refs[L][...],
                  preferred_element_type=jnp.float32)        # (TM, out_dim)
    acc = res if acc is None else acc + res
    out_ref[...] = (acc + b_refs[L][...]).astype(out_ref.dtype)


def naive_mlp_pallas(x, params, hidden_dims, *, block_rows=128):
    hidden_dims = tuple(int(h) for h in hidden_dims)
    L = len(hidden_dims)
    z_dim = int(x.shape[-1])
    out_dim = int(params["w_out"].shape[1])

    lead_shape = x.shape[:-1]
    M = int(np.prod(lead_shape)) if len(lead_shape) else 1
    x2 = x.reshape(M, z_dim).astype(jnp.float32)

    # Row-block size: multiple of 8 sublanes, >=128 rows per matmul when possible.
    tm = min(block_rows, -(-M // 8) * 8)
    tm = max(tm, 8)
    m_pad = -(-M // tm) * tm
    if m_pad != M:
        x2 = jnp.pad(x2, ((0, m_pad - M), (0, 0)))

    # Split W_out into per-input slabs (removes the activation concat entirely)
    # and stack each slab with the corresponding layer weight (one matmul/level).
    w_out = params["w_out"].astype(jnp.float32)
    sizes = [z_dim] + list(hidden_dims)
    offs = np.cumsum([0] + sizes)
    slabs = [w_out[int(offs[i]):int(offs[i + 1]), :] for i in range(L + 1)]

    w_stacks = []
    for i in range(L):
        w_stacks.append(
            jnp.concatenate([params[f"w{i}"].astype(jnp.float32), slabs[i]],
                            axis=1).astype(jnp.bfloat16))
    w_stacks.append(slabs[L].astype(jnp.bfloat16))

    biases = [params[f"b{i}"].astype(jnp.float32) for i in range(L)]
    biases.append(params["b_out"].astype(jnp.float32))

    grid = (m_pad // tm,)
    in_specs = [pl.BlockSpec((tm, z_dim), lambda m: (m, 0))]
    in_specs += [pl.BlockSpec(tuple(w.shape), lambda m: (0, 0)) for w in w_stacks]
    in_specs += [pl.BlockSpec(tuple(b.shape), lambda m: (0, 0)) for b in biases]
    out_specs = pl.BlockSpec((tm, out_dim), lambda m: (m, 0))
    out_shape = jax.ShapeDtypeStruct((m_pad, out_dim), jnp.float32)

    # Advisory cost estimate for the XLA scheduler.
    dims_in = [z_dim] + list(hidden_dims)
    flops = 0
    for i in range(L):
        flops += 2 * m_pad * dims_in[i] * (hidden_dims[i] + out_dim)
    flops += 2 * m_pad * dims_in[L] * out_dim
    bytes_accessed = (m_pad * z_dim * 4 + m_pad * out_dim * 4
                      + sum(int(w.size) * 2 for w in w_stacks)
                      + sum(int(b.size) * 4 for b in biases))
    cost = pl.CostEstimate(flops=int(flops), transcendentals=0,
                           bytes_accessed=int(bytes_accessed))

    kernel = functools.partial(_naive_mlp_kernel, hidden_dims=hidden_dims)
    y = pl.pallas_call(
        kernel,
        grid=grid,
        in_specs=in_specs,
        out_specs=out_specs,
        out_shape=out_shape,
        compiler_params=pltpu.CompilerParams(dimension_semantics=("parallel",)),
        cost_estimate=cost,
    )(x2, *w_stacks, *biases)

    return y[:M].reshape(tuple(lead_shape) + (out_dim,))


def naive_mlp_ref(x, params, hidden_dims):
    """Pure-JAX reference mirroring the PyTorch forward (use_bn=False).

    Uses the same bf16-at-the-MXU-boundary / f32-accumulate precision as the
    kernel so the comparison tolerance can stay tight.
    """
    h = x.astype(jnp.float32)
    feats = [h]
    for i, _ in enumerate(hidden_dims):
        z = jnp.dot(h.astype(jnp.bfloat16),
                    params[f"w{i}"].astype(jnp.bfloat16),
                    preferred_element_type=jnp.float32) + params[f"b{i}"]
        h = jnp.where(z >= 0, z, 0.01 * z)
        feats.append(h)
    f = jnp.concatenate(feats, axis=-1)
    y = jnp.dot(f.astype(jnp.bfloat16),
                params["w_out"].astype(jnp.bfloat16),
                preferred_element_type=jnp.float32) + params["b_out"]
    return y


def make_params(key, z_dim, out_dim, hidden_dims):
    shapes = {}
    c_in = z_dim
    for i, h in enumerate(hidden_dims):
        shapes[f"w{i}"] = (c_in, h)
        shapes[f"b{i}"] = (1, h)
        c_in = h
    c_wide = z_dim + sum(hidden_dims)
    shapes["w_out"] = (c_wide, out_dim)
    shapes["b_out"] = (1, out_dim)

    params = {}
    keys = jax.random.split(key, len(shapes))
    for k_, (name, shp) in zip(keys, sorted(shapes.items())):
        params[name] = jax.random.normal(k_, shp, jnp.float32) * 0.1
    return params


if __name__ == "__main__":
    # Small config consistent with the module: z_dim=32, two hidden layers,
    # out_dim=128 (lane-dense output stores), x = (batch=2, 16x16 tokens, z_dim).
    z_dim, out_dim = 32, 128
    hidden_dims = (64, 128)
    x_shape = (2, 16, 16, z_dim)     # 512 rows -> grid of 4 parallel steps of 128 rows

    root = jax.random.PRNGKey(0)
    k_x, k_w = jax.random.split(root)
    x = jax.random.normal(k_x, x_shape, jnp.float32)
    params = make_params(k_w, z_dim, out_dim, hidden_dims)

    y_pl = naive_mlp_pallas(x, params, hidden_dims, block_rows=128)
    jax.block_until_ready(y_pl)

    y_ref = naive_mlp_ref(x, params, hidden_dims)
    np.testing.assert_allclose(np.asarray(y_pl), np.asarray(y_ref),
                               rtol=1e-3, atol=1e-3)

    print("KERNEL_OK")
</pallas_src>

<mosaic_0001>
module attributes {stable_mosaic.version = 11 : i64} {
  func.func @_naive_mlp_kernel(%arg0: i32, %arg1: memref<128x32xf32, #tpu.memory_space<vmem>>, %arg2: memref<32x192xbf16, #tpu.memory_space<vmem>>, %arg3: memref<64x256xbf16, #tpu.memory_space<vmem>>, %arg4: memref<128x128xbf16, #tpu.memory_space<vmem>>, %arg5: memref<1x64xf32, #tpu.memory_space<vmem>>, %arg6: memref<1x128xf32, #tpu.memory_space<vmem>>, %arg7: memref<1x128xf32, #tpu.memory_space<vmem>>, %arg8: memref<128x128xf32, #tpu.memory_space<vmem>>) attributes {dimension_semantics = [#tpu.dimension_semantics<parallel>], iteration_bounds = array<i64: 4>, scalar_prefetch = 0 : i64, scratch_operands = 0 : i64, tpu.core_type = #tpu.core_type<tc>, window_params = [{transform_indices = @transform_0, window_bounds = array<i64: 128, 32>}, {pipeline_mode = #tpu.pipeline_mode<synchronous>, transform_indices = @transform_1, window_bounds = array<i64: 32, 192>}, {pipeline_mode = #tpu.pipeline_mode<synchronous>, transform_indices = @transform_2, window_bounds = array<i64: 64, 256>}, {pipeline_mode = #tpu.pipeline_mode<synchronous>, transform_indices = @transform_3, window_bounds = array<i64: 128, 128>}, {pipeline_mode = #tpu.pipeline_mode<synchronous>, transform_indices = @transform_4, window_bounds = array<i64: 1, 64>}, {pipeline_mode = #tpu.pipeline_mode<synchronous>, transform_indices = @transform_5, window_bounds = array<i64: 1, 128>}, {pipeline_mode = #tpu.pipeline_mode<synchronous>, transform_indices = @transform_6, window_bounds = array<i64: 1, 128>}, {transform_indices = @transform_7, window_bounds = array<i64: 128, 128>}]} {
    %c0 = arith.constant 0 : index
    %c0_0 = arith.constant 0 : index
    %0 = vector.load %arg1[%c0, %c0_0] : memref<128x32xf32, #tpu.memory_space<vmem>>, vector<128x32xf32>
    %1 = arith.truncf %0 : vector<128x32xf32> to vector<128x32xbf16>
    %c0_1 = arith.constant 0 : index
    %c0_2 = arith.constant 0 : index
    %2 = vector.load %arg2[%c0_1, %c0_2] : memref<32x192xbf16, #tpu.memory_space<vmem>>, vector<32x192xbf16>
    %cst = arith.constant dense<0.000000e+00> : vector<128x192xf32>
    %3 = tpu.matmul %1, %2, %cst {dimension_numbers = #tpu.dot_dimension_numbers<[1], [0], [0], [1], [0, 0, 1, 1], [], []>} : vector<128x32xbf16>, vector<32x192xbf16>, vector<128x192xf32> -> vector<128x192xf32>
    %4 = vector.extract_strided_slice %3 {offsets = [0, 0], sizes = [128, 64], strides = [1, 1]} : vector<128x192xf32> to vector<128x64xf32>
    %c0_3 = arith.constant 0 : index
    %c0_4 = arith.constant 0 : index
    %5 = vector.load %arg5[%c0_3, %c0_4] : memref<1x64xf32, #tpu.memory_space<vmem>>, vector<1x64xf32>
    %6 = vector.broadcast %5 : vector<1x64xf32> to vector<128x64xf32>
    %7 = arith.addf %4, %6 : vector<128x64xf32>
    %8 = vector.extract_strided_slice %3 {offsets = [0, 64], sizes = [128, 128], strides = [1, 1]} : vector<128x192xf32> to vector<128x128xf32>
    %cst_5 = arith.constant 0.000000e+00 : f32
    %9 = vector.broadcast %cst_5 : f32 to vector<128x64xf32>
    %10 = arith.cmpf oge, %7, %9 : vector<128x64xf32>
    %cst_6 = arith.constant 0.00999999977 : f32
    %11 = vector.broadcast %cst_6 : f32 to vector<128x64xf32>
    %12 = arith.mulf %11, %7 : vector<128x64xf32>
    %13 = arith.select %10, %7, %12 : vector<128x64xi1>, vector<128x64xf32>
    %14 = arith.truncf %13 : vector<128x64xf32> to vector<128x64xbf16>
    %c0_7 = arith.constant 0 : index
    %c0_8 = arith.constant 0 : index
    %15 = vector.load %arg3[%c0_7, %c0_8] : memref<64x256xbf16, #tpu.memory_space<vmem>>, vector<64x256xbf16>
    %cst_9 = arith.constant dense<0.000000e+00> : vector<128x256xf32>
    %16 = tpu.matmul %14, %15, %cst_9 {dimension_numbers = #tpu.dot_dimension_numbers<[1], [0], [0], [1], [0, 0, 1, 1], [], []>} : vector<128x64xbf16>, vector<64x256xbf16>, vector<128x256xf32> -> vector<128x256xf32>
    %17 = vector.extract_strided_slice %16 {offsets = [0, 0], sizes = [128, 128], strides = [1, 1]} : vector<128x256xf32> to vector<128x128xf32>
    %c0_10 = arith.constant 0 : index
    %c0_11 = arith.constant 0 : index
    %18 = vector.load %arg6[%c0_10, %c0_11] : memref<1x128xf32, #tpu.memory_space<vmem>>, vector<1x128xf32>
    %19 = vector.broadcast %18 : vector<1x128xf32> to vector<128x128xf32>
    %20 = arith.addf %17, %19 : vector<128x128xf32>
    %21 = vector.extract_strided_slice %16 {offsets = [0, 128], sizes = [128, 128], strides = [1, 1]} : vector<128x256xf32> to vector<128x128xf32>
    %22 = arith.addf %8, %21 : vector<128x128xf32>
    %cst_12 = arith.constant 0.000000e+00 : f32
    %23 = vector.broadcast %cst_12 : f32 to vector<128x128xf32>
    %24 = arith.cmpf oge, %20, %23 : vector<128x128xf32>
    %cst_13 = arith.constant 0.00999999977 : f32
    %25 = vector.broadcast %cst_13 : f32 to vector<128x128xf32>
    %26 = arith.mulf %25, %20 : vector<128x128xf32>
    %27 = arith.select %24, %20, %26 : vector<128x128xi1>, vector<128x128xf32>
    %28 = arith.truncf %27 : vector<128x128xf32> to vector<128x128xbf16>
    %c0_14 = arith.constant 0 : index
    %c0_15 = arith.constant 0 : index
    %29 = vector.load %arg4[%c0_14, %c0_15] : memref<128x128xbf16, #tpu.memory_space<vmem>>, vector<128x128xbf16>
    %cst_16 = arith.constant dense<0.000000e+00> : vector<128x128xf32>
    %30 = tpu.matmul %28, %29, %cst_16 {dimension_numbers = #tpu.dot_dimension_numbers<[1], [0], [0], [1], [0, 0, 1, 1], [], []>} : vector<128x128xbf16>, vector<128x128xbf16>, vector<128x128xf32> -> vector<128x128xf32>
    %31 = arith.addf %22, %30 : vector<128x128xf32>
    %c0_17 = arith.constant 0 : index
    %c0_18 = arith.constant 0 : index
    %32 = vector.load %arg7[%c0_17, %c0_18] : memref<1x128xf32, #tpu.memory_space<vmem>>, vector<1x128xf32>
    %33 = vector.broadcast %32 : vector<1x128xf32> to vector<128x128xf32>
    %34 = arith.addf %31, %33 : vector<128x128xf32>
    %c0_19 = arith.constant 0 : index
    %c0_20 = arith.constant 0 : index
    %35 = vector.load %arg8[%c0_19, %c0_20] : memref<128x128xf32, #tpu.memory_space<vmem>>, vector<128x128xf32>
    tpu.vector_store %arg8[%c0_19, %c0_20], %34 {strides = array<i32>} : memref<128x128xf32, #tpu.memory_space<vmem>>, vector<128x128xf32>,
    return
  }
  func.func @transform_0(%arg0: i32) -> (i32, i32) {
    %c0_i32 = arith.constant 0 : i32
    %c0_i32_0 = arith.constant 0 : i32
    return %arg0, %c0_i32 : i32, i32
  }
  func.func @transform_1(%arg0: i32) -> (i32, i32) {
    %c0_i32 = arith.constant 0 : i32
    %c0_i32_0 = arith.constant 0 : i32
    %c0_i32_1 = arith.constant 0 : i32
    return %c0_i32, %c0_i32_0 : i32, i32
  }
  func.func @transform_2(%arg0: i32) -> (i32, i32) {
    %c0_i32 = arith.constant 0 : i32
    %c0_i32_0 = arith.constant 0 : i32
    %c0_i32_1 = arith.constant 0 : i32
    return %c0_i32, %c0_i32_0 : i32, i32
  }
  func.func @transform_3(%arg0: i32) -> (i32, i32) {
    %c0_i32 = arith.constant 0 : i32
    %c0_i32_0 = arith.constant 0 : i32
    %c0_i32_1 = arith.constant 0 : i32
    return %c0_i32, %c0_i32_0 : i32, i32
  }
  func.func @transform_4(%arg0: i32) -> (i32, i32) {
    %c0_i32 = arith.constant 0 : i32
    %c0_i32_0 = arith.constant 0 : i32
    %c0_i32_1 = arith.constant 0 : i32
    return %c0_i32, %c0_i32_0 : i32, i32
  }
  func.func @transform_5(%arg0: i32) -> (i32, i32) {
    %c0_i32 = arith.constant 0 : i32
    %c0_i32_0 = arith.constant 0 : i32
    %c0_i32_1 = arith.constant 0 : i32
    return %c0_i32, %c0_i32_0 : i32, i32
  }
  func.func @transform_6(%arg0: i32) -> (i32, i32) {
    %c0_i32 = arith.constant 0 : i32
    %c0_i32_0 = arith.constant 0 : i32
    %c0_i32_1 = arith.constant 0 : i32
    return %c0_i32, %c0_i32_0 : i32, i32
  }
  func.func @transform_7(%arg0: i32) -> (i32, i32) {
    %c0_i32 = arith.constant 0 : i32
    %c0_i32_0 = arith.constant 0 : i32
    return %arg0, %c0_i32 : i32, i32
  }
}

</mosaic_0001>

<llo_original>
// kernel: tpu_custom_call.1
$region0: #{tpu_custom_call.1}
  #allocation0 [shape = 'u32[]', space=smem, size = 0x4, offset = 0x4, fixed_abs, tag = 'smem constant byte address 0x4 - core index']
  #allocation1 [shape = 'u32[144,128]{1,0:T(1,128)}', space=vmem, size = 0x12000, scoped, tag = 'internal scratch']
  %s0 = inlined_call_operand.vmem [shape: f32[512,32], index: 0, kind: input, shape index: {}]
  %s1 = inlined_call_operand.vmem [shape: bf16[32,192], index: 1, kind: input, shape index: {}]
  %s2 = inlined_call_operand.vmem [shape: bf16[64,256], index: 2, kind: input, shape index: {}]
  %s3 = inlined_call_operand.vmem [shape: bf16[128,128], index: 3, kind: input, shape index: {}]
  %s4 = inlined_call_operand.vmem [shape: f32[1,64], index: 4, kind: input, shape index: {}]
  %s5 = inlined_call_operand.vmem [shape: f32[1,128], index: 5, kind: input, shape index: {}]
  %s6 = inlined_call_operand.vmem [shape: f32[1,128], index: 6, kind: input, shape index: {}]
  %s7 = inlined_call_operand.hbm [shape: f32[512,128], index: 7, kind: output, shape index: {}]
  %s8 = sld [smem:[#allocation0]]
  $region61: #{tpu_custom_call.1} parent=0
    _
  %s10 = ssub.s32 1, %s8
  %s11 = scalar_select 0, %s10, %s8
  $region1: #{tpu_custom_call.1} parent=0
    #allocation2 [shape = 'u8[131072]{0}', space=vmem, size = 0x20000, scoped, tag = 'output window, operand 0']
    #allocation3 [shape = 's32[2]{0}', space=sflag, size = 0x8, scoped, tag = 'scoped memory for tpu_custom_call.1']
    %12 = vsyncpa [#allocation3], 0
    %s13 = scalar_lea.sflag [#allocation3], 1
    %14 = vsyncpa %s13, 0
    loop: start=0, step=1, limit=6
    $region2: #{tpu_custom_call.1} parent=1 // loop_pre_header
      _
    $region3: #{tpu_custom_call.1} parent=1 // loop_header
      %s16 = sphi 0, %s20
      %p17 = scmp.ge.s32.totalorder %s16, 6
      %s26 = sphi 0, %s28
      %s29 = sphi 0, %s26
      %s30 = sphi 0, %s29
      %s46 = sphi 0, %s30
      %s50 = sphi 0, %s50
      %s52 = sphi 0, %s50
      %s53 = sphi 0, %s52
      %s67 = sphi 0, %s53
      %s71 = sphi 0, %s71
      %s73 = sphi 0, %s71
      %s74 = sphi 0, %s73
      %s88 = sphi 0, %s74
      %s92 = sphi 0, %s92
      %s94 = sphi 0, %s92
      %s95 = sphi 0, %s94
      %s109 = sphi 0, %s95
      %s113 = sphi 0, %s113
      %s115 = sphi 0, %s113
      %s116 = sphi 0, %s115
      %s130 = sphi 0, %s116
      %s134 = sphi 0, %s134
      %s136 = sphi 0, %s134
      %s137 = sphi 0, %s136
      %s151 = sphi 0, %s137
      %s155 = sphi 0, %s155
      %s157 = sphi 0, %s155
      %s158 = sphi 0, %s157
      %s172 = sphi 0, %s158
      %s178 = sphi 0, %s180
      %s181 = sphi 0, %s178
      %s182 = sphi 0, %s181
      %s198 = sphi 0, %s182
    $region4: #{tpu_custom_call.1} parent=1 // loop_header_branch
      %19 = sbr.rel (%p17) target = $region8
    $region5: #{tpu_custom_call.1} parent=1 // loop_body
      %s21 = ssub.s32 %s16, 1
      %s22 = ssub.s32 %s16, 2
      %s23 = sadd.s32 %s16, 1
      %s24 = ssub.s32 %s16, %s23
      %p25 = scmp.eq.s32.totalorder %s24, 0
      %s27 = sadd.s32 %s26, 1
      %s28 = scalar_select %p25, %s26, %s27
      %p31 = pneg %p25
      %p32 = scmp.eq.s32.totalorder %s16, 3
      %p33 = por %p31, %p32
      %p34 = scmp.ne.s32.totalorder %s26, %s29
      %p35 = scmp.eq.s32.totalorder %s16, 0
      %p36 = por %p34, %p35
      %p37 = scmp.ne.s32.totalorder %s26, %s29
      %p38 = scmp.eq.s32.totalorder %s21, 3
      %p39 = por %p37, %p38
      %p40 = scmp.ne.s32.totalorder %s29, %s30
      %p41 = scmp.eq.s32.totalorder %s21, 0
      %p42 = por %p40, %p41
      %p43 = scmp.ne.s32.totalorder %s29, %s30
      %p44 = scmp.eq.s32.totalorder %s22, 3
      %p45 = por %p43, %p44
      %p47 = scmp.ne.s32.totalorder %s30, %s46
      %p48 = scmp.eq.s32.totalorder %s22, 0
      %p49 = por %p47, %p48
      %s51 = sadd.s32 %s50, 1
      %p54 = scmp.eq.s32.totalorder %s16, 3
      %p55 = scmp.ne.s32.totalorder %s50, %s52
      %p56 = scmp.eq.s32.totalorder %s16, 0
      %p57 = por %p55, %p56
      %p58 = scmp.ne.s32.totalorder %s50, %s52
      %p59 = scmp.eq.s32.totalorder %s21, 3
      %p60 = por %p58, %p59
      %p61 = scmp.ne.s32.totalorder %s52, %s53
      %p62 = scmp.eq.s32.totalorder %s21, 0
      %p63 = por %p61, %p62
      %p64 = scmp.ne.s32.totalorder %s52, %s53
      %p65 = scmp.eq.s32.totalorder %s22, 3
      %p66 = por %p64, %p65
      %p68 = scmp.ne.s32.totalorder %s53, %s67
      %p69 = scmp.eq.s32.totalorder %s22, 0
      %p70 = por %p68, %p69
      %s72 = sadd.s32 %s71, 1
      %p75 = scmp.eq.s32.totalorder %s16, 3
      %p76 = scmp.ne.s32.totalorder %s71, %s73
      %p77 = scmp.eq.s32.totalorder %s16, 0
      %p78 = por %p76, %p77
      %p79 = scmp.ne.s32.totalorder %s71, %s73
      %p80 = scmp.eq.s32.totalorder %s21, 3
      %p81 = por %p79, %p80
      %p82 = scmp.ne.s32.totalorder %s73, %s74
      %p83 = scmp.eq.s32.totalorder %s21, 0
      %p84 = por %p82, %p83
      %p85 = scmp.ne.s32.totalorder %s73, %s74
      %p86 = scmp.eq.s32.totalorder %s22, 3
      %p87 = por %p85, %p86
      %p89 = scmp.ne.s32.totalorder %s74, %s88
      %p90 = scmp.eq.s32.totalorder %s22, 0
      %p91 = por %p89, %p90
      %s93 = sadd.s32 %s92, 1
      %p96 = scmp.eq.s32.totalorder %s16, 3
      %p97 = scmp.ne.s32.totalorder %s92, %s94
      %p98 = scmp.eq.s32.totalorder %s16, 0
      %p99 = por %p97, %p98
      %p100 = scmp.ne.s32.totalorder %s92, %s94
      %p101 = scmp.eq.s32.totalorder %s21, 3
      %p102 = por %p100, %p101
      %p103 = scmp.ne.s32.totalorder %s94, %s95
      %p104 = scmp.eq.s32.totalorder %s21, 0
      %p105 = por %p103, %p104
      %p106 = scmp.ne.s32.totalorder %s94, %s95
      %p107 = scmp.eq.s32.totalorder %s22, 3
      %p108 = por %p106, %p107
      %p110 = scmp.ne.s32.totalorder %s95, %s109
      %p111 = scmp.eq.s32.totalorder %s22, 0
      %p112 = por %p110, %p111
      %s114 = sadd.s32 %s113, 1
      %p117 = scmp.eq.s32.totalorder %s16, 3
      %p118 = scmp.ne.s32.totalorder %s113, %s115
      %p119 = scmp.eq.s32.totalorder %s16, 0
      %p120 = por %p118, %p119
      %p121 = scmp.ne.s32.totalorder %s113, %s115
      %p122 = scmp.eq.s32.totalorder %s21, 3
      %p123 = por %p121, %p122
      %p124 = scmp.ne.s32.totalorder %s115, %s116
      %p125 = scmp.eq.s32.totalorder %s21, 0
      %p126 = por %p124, %p125
      %p127 = scmp.ne.s32.totalorder %s115, %s116
      %p128 = scmp.eq.s32.totalorder %s22, 3
      %p129 = por %p127, %p128
      %p131 = scmp.ne.s32.totalorder %s116, %s130
      %p132 = scmp.eq.s32.totalorder %s22, 0
      %p133 = por %p131, %p132
      %s135 = sadd.s32 %s134, 1
      %p138 = scmp.eq.s32.totalorder %s16, 3
      %p139 = scmp.ne.s32.totalorder %s134, %s136
      %p140 = scmp.eq.s32.totalorder %s16, 0
      %p141 = por %p139, %p140
      %p142 = scmp.ne.s32.totalorder %s134, %s136
      %p143 = scmp.eq.s32.totalorder %s21, 3
      %p144 = por %p142, %p143
      %p145 = scmp.ne.s32.totalorder %s136, %s137
      %p146 = scmp.eq.s32.totalorder %s21, 0
      %p147 = por %p145, %p146
      %p148 = scmp.ne.s32.totalorder %s136, %s137
      %p149 = scmp.eq.s32.totalorder %s22, 3
      %p150 = por %p148, %p149
      %p152 = scmp.ne.s32.totalorder %s137, %s151
      %p153 = scmp.eq.s32.totalorder %s22, 0
      %p154 = por %p152, %p153
      %s156 = sadd.s32 %s155, 1
      %p159 = scmp.eq.s32.totalorder %s16, 3
      %p160 = scmp.ne.s32.totalorder %s155, %s157
      %p161 = scmp.eq.s32.totalorder %s16, 0
      %p162 = por %p160, %p161
      %p163 = scmp.ne.s32.totalorder %s155, %s157
      %p164 = scmp.eq.s32.totalorder %s21, 3
      %p165 = por %p163, %p164
      %p166 = scmp.ne.s32.totalorder %s157, %s158
      %p167 = scmp.eq.s32.totalorder %s21, 0
      %p168 = por %p166, %p167
      %p169 = scmp.ne.s32.totalorder %s157, %s158
      %p170 = scmp.eq.s32.totalorder %s22, 3
      %p171 = por %p169, %p170
      %p173 = scmp.ne.s32.totalorder %s158, %s172
      %p174 = scmp.eq.s32.totalorder %s22, 0
      %p175 = por %p173, %p174
      %s176 = ssub.s32 %s16, %s23
      %p177 = scmp.eq.s32.totalorder %s176, 0
      %s179 = sadd.s32 %s178, 1
      %s180 = scalar_select %p177, %s178, %s179
      %p183 = pneg %p177
      %p184 = scmp.eq.s32.totalorder %s16, 3
      %p185 = por %p183, %p184
      %p186 = scmp.ne.s32.totalorder %s178, %s181
      %p187 = scmp.eq.s32.totalorder %s16, 0
      %p188 = por %p186, %p187
      %p189 = scmp.ne.s32.totalorder %s178, %s181
      %p190 = scmp.eq.s32.totalorder %s21, 3
      %p191 = por %p189, %p190
      %p192 = scmp.ne.s32.totalorder %s181, %s182
      %p193 = scmp.eq.s32.totalorder %s21, 0
      %p194 = por %p192, %p193
      %p195 = scmp.ne.s32.totalorder %s181, %s182
      %p196 = scmp.eq.s32.totalorder %s22, 3
      %p197 = por %p195, %p196
      %p199 = scmp.ne.s32.totalorder %s182, %s198
      %p200 = scmp.eq.s32.totalorder %s22, 0
      %p201 = por %p199, %p200
      %p202 = scmp.le.s32.totalorder 1, %s16
      %p203 = scmp.lt.s32.totalorder %s16, 5
      %p204 = pnand %p202, %p203
      %p205 = pneg %p204
      // Predicated region
      $region9: #{tpu_custom_call.1} parent=5 // pred_check
        _
      $region10: #{tpu_custom_call.1} parent=5 // pred_check_branch
        %207 = sbr.rel (%p204) target = $region12
      $region11: #{tpu_custom_call.1} parent=5 // pred_region
        %s208 = ssub.s32 %s16, 1
        // Predicated region
        $region13: #{tpu_custom_call.1} parent=11 // pred_check
          %p209 = pneg %p63
        $region14: #{tpu_custom_call.1} parent=11 // pred_check_branch
          %211 = sbr.rel (%p209) target = $region16
        $region15: #{tpu_custom_call.1} parent=11 // pred_region
          _
        $region16: #{tpu_custom_call.1} parent=11 // pred_fallthru
          _
        // Predicated region
        $region17: #{tpu_custom_call.1} parent=11 // pred_check
          %p212 = pneg %p84
        $region18: #{tpu_custom_call.1} parent=11 // pred_check_branch
          %214 = sbr.rel (%p212) target = $region20
        $region19: #{tpu_custom_call.1} parent=11 // pred_region
          _
        $region20: #{tpu_custom_call.1} parent=11 // pred_fallthru
          _
        // Predicated region
        $region21: #{tpu_custom_call.1} parent=11 // pred_check
          %p215 = pneg %p105
        $region22: #{tpu_custom_call.1} parent=11 // pred_check_branch
          %217 = sbr.rel (%p215) target = $region24
        $region23: #{tpu_custom_call.1} parent=11 // pred_region
          _
        $region24: #{tpu_custom_call.1} parent=11 // pred_fallthru
          _
        // Predicated region
        $region25: #{tpu_custom_call.1} parent=11 // pred_check
          %p218 = pneg %p126
        $region26: #{tpu_custom_call.1} parent=11 // pred_check_branch
          %220 = sbr.rel (%p218) target = $region28
        $region27: #{tpu_custom_call.1} parent=11 // pred_region
          _
        $region28: #{tpu_custom_call.1} parent=11 // pred_fallthru
          _
        // Predicated region
        $region29: #{tpu_custom_call.1} parent=11 // pred_check
          %p221 = pneg %p147
        $region30: #{tpu_custom_call.1} parent=11 // pred_check_branch
          %223 = sbr.rel (%p221) target = $region32
        $region31: #{tpu_custom_call.1} parent=11 // pred_region
          _
        $region32: #{tpu_custom_call.1} parent=11 // pred_fallthru
          _
        // Predicated region
        $region33: #{tpu_custom_call.1} parent=11 // pred_check
          %p224 = pneg %p168
        $region34: #{tpu_custom_call.1} parent=11 // pred_check_branch
          %226 = sbr.rel (%p224) target = $region36
        $region35: #{tpu_custom_call.1} parent=11 // pred_region
          _
        $region36: #{tpu_custom_call.1} parent=11 // pred_fallthru
          _
      $region12: #{tpu_custom_call.1} parent=5 // pred_fallthru
        _
      %p227 = scmp.lt.s32.totalorder %s16, 4
      // Predicated region
      $region37: #{tpu_custom_call.1} parent=5 // pred_check
        %p228 = pneg %p227
      $region38: #{tpu_custom_call.1} parent=5 // pred_check_branch
        %230 = sbr.rel (%p228) target = $region40
      $region39: #{tpu_custom_call.1} parent=5 // pred_region
        // Predicated region
        $region41: #{tpu_custom_call.1} parent=39 // pred_check
          %p231 = pneg %p36
        $region42: #{tpu_custom_call.1} parent=39 // pred_check_branch
          %233 = sbr.rel (%p231) target = $region44
        $region43: #{tpu_custom_call.1} parent=39 // pred_region
          %s234 = smul.u32 16, %s16
          %p235 = scmp.lt.s32.totalorder %s234, 63
          %s236 = scalar_select %p235, %s234, 63
          %s237 = smul.addr %s236, 8
          %s238 = scalar_lea.vmem %s0, %s237
          %s239 = smul.u32 16, %s16
        $region44: #{tpu_custom_call.1} parent=39 // pred_fallthru
          _
      $region40: #{tpu_custom_call.1} parent=5 // pred_fallthru
        _
      %p240 = scmp.le.s32.totalorder 1, %s16
      %p241 = scmp.lt.s32.totalorder %s16, 5
      %p242 = pnand %p240, %p241
      %p243 = pneg %p242
      // Predicated region
      $region45: #{tpu_custom_call.1} parent=5 // pred_check
        _
      $region46: #{tpu_custom_call.1} parent=5 // pred_check_branch
        %245 = sbr.rel (%p242) target = $region48
      $region47: #{tpu_custom_call.1} parent=5 // pred_region
        %s246 = ssub.s32 %s16, 1
        %s247 = smul.u32 16, %s21
        %p248 = scmp.lt.s32.totalorder %s247, 63
        %s249 = scalar_select %p248, %s247, 63
        %s250 = smul.addr %s249, 8
        %s251 = scalar_lea.vmem %s0, %s250
        %p252 = pneg %p42
        %p253 = pneg %p39
        %p254 = pneg %p63
        %p255 = pneg %p60
        %p256 = pneg %p84
        %p257 = pneg %p81
        %p258 = pneg %p105
        %p259 = pneg %p102
        %p260 = pneg %p126
        %p261 = pneg %p123
        %p262 = pneg %p147
        %p263 = pneg %p144
        %p264 = pneg %p168
        %p265 = pneg %p165
        %p266 = pneg %p194
        %p267 = pneg %p191
        %s268 = sand.u32 %s181, 1
        %s269 = scalar_lea.sflag [#allocation3], %s268
        %s270 = sand.u32 %s181, 1
        %s271 = smul.addr %s270, 128
        %s272 = scalar_lea.vmem [#allocation2], %s271
        %s273 = smul.u32 16, %s21
        %p274 = scmp.lt.s32.totalorder %s273, 63
        %s275 = scalar_select %p274, %s273, 63
        %s276 = smul.addr %s275, 8
        %s277 = scalar_lea.vmem %s0, %s276
        %s278 = smul.u32 16, %s21
        %s279 = smul.u32 16, %s21
        %v281 = vld [vmem:[%s277] sm:$0xff]
        %v282 = vld [vmem:[%s277 + $0x8] sm:$0xff]
        %v283 = vld [vmem:[%s277 + $0x10] sm:$0xff]
        %v284 = vld [vmem:[%s277 + $0x18] sm:$0xff]
        %v285 = vld [vmem:[%s277 + $0x20] sm:$0xff]
        %v286 = vld [vmem:[%s277 + $0x28] sm:$0xff]
        %v287 = vld [vmem:[%s277 + $0x30] sm:$0xff]
        %v288 = vld [vmem:[%s277 + $0x38] sm:$0xff]
        %v289 = vld [vmem:[%s277 + $0x40] sm:$0xff]
        %v290 = vld [vmem:[%s277 + $0x48] sm:$0xff]
        %v291 = vld [vmem:[%s277 + $0x50] sm:$0xff]
        %v292 = vld [vmem:[%s277 + $0x58] sm:$0xff]
        %v293 = vld [vmem:[%s277 + $0x60] sm:$0xff]
        %v294 = vld [vmem:[%s277 + $0x68] sm:$0xff]
        %v295 = vld [vmem:[%s277 + $0x70] sm:$0xff]
        %v296 = vld [vmem:[%s277 + $0x78] sm:$0xff]
        %v297 = vpack.c.bf16 %v282, %v281
        %v298 = vpack.c.bf16 %v284, %v283
        %v299 = vpack.c.bf16 %v286, %v285
        %v300 = vpack.c.bf16 %v288, %v287
        %v301 = vpack.c.bf16 %v290, %v289
        %v302 = vpack.c.bf16 %v292, %v291
        %v303 = vpack.c.bf16 %v294, %v293
        %v304 = vpack.c.bf16 %v296, %v295
        %v305 = vld [vmem:[%s1] sm:$0xff]
        %v306 = vld [vmem:[%s1 + $0x8] sm:$0xff]
        %v307 = vld [vmem:[%s1 + $0x10] sm:$0xff]
        %v308 = vld [vmem:[%s1 + $0x18] sm:$0xff]
        %v313 = vunpack.c.l.b16 %v305
        %v314 = vunpack.c.h.b16 %v305
        %v315 = vunpack.c.l.b16 %v306
        %v316 = vunpack.c.h.b16 %v306
        %v317 = vunpack.c.l.b16 %v307
        %v318 = vunpack.c.h.b16 %v307
        %v319 = vunpack.c.l.b16 %v308
        %v320 = vunpack.c.h.b16 %v308
        %v321 = vpack.c.b16 %v315, %v313
        %v322 = vpack.c.b16 %v316, %v314
        %v323 = vpack.c.b16 %v319, %v317
        %v324 = vpack.c.b16 %v320, %v318
        %vm329 = vcmask 261120
        %v331 = vsel %vm329, %v297, 0
        %v334 = vsel %vm329, %v298, 0
        %v337 = vsel %vm329, %v299, 0
        %v340 = vsel %vm329, %v300, 0
        %v343 = vsel %vm329, %v301, 0
        %v346 = vsel %vm329, %v302, 0
        %v349 = vsel %vm329, %v303, 0
        %v352 = vsel %vm329, %v304, 0
        %354 = vmatprep.subr.bf16.mxu0 %v322
        %355 = vmatpush1.bf16.msra.mxu0 %v321
        %356 = vmatprep.subr.bf16.mxu0 %v324
        %357 = vmatpush1.bf16.msra.mxu0 %v323
        %358 = vmatprep.subr.bf16.mxu0 0
        %359 = vmatpush1.bf16.msra.mxu0 0
        %360 = vmatprep.subr.bf16.mxu0 0
        %361 = vmatpush1.bf16.msra.mxu0 0
        %362 = vmatprep.subr.bf16.mxu0 0
        %363 = vmatpush1.bf16.msra.mxu0 0
        %364 = vmatprep.subr.bf16.mxu0 0
        %365 = vmatpush1.bf16.msra.mxu0 0
        %366 = vmatprep.subr.bf16.mxu0 0
        %367 = vmatpush1.bf16.msra.mxu0 0
        %368 = vmatprep.subr.bf16.mxu0 0
        %369 = vmatpush1.bf16.msra.mxu0 0
        %370 = vmatprep.subr.bf16.mxu0 0
        %371 = vmatpush1.bf16.msra.mxu0 0
        %372 = vmatprep.subr.bf16.mxu0 0
        %373 = vmatpush1.bf16.msra.mxu0 0
        %374 = vmatprep.subr.bf16.mxu0 0
        %375 = vmatpush1.bf16.msra.mxu0 0
        %376 = vmatprep.subr.bf16.mxu0 0
        %377 = vmatpush1.bf16.msra.mxu0 0
        %378 = vmatprep.subr.bf16.mxu0 0
        %379 = vmatpush1.bf16.msra.mxu0 0
        %380 = vmatprep.subr.bf16.mxu0 0
        %381 = vmatpush1.bf16.msra.mxu0 0
        %382 = vmatprep.subr.bf16.mxu0 0
        %383 = vmatpush1.bf16.msra.mxu0 0
        %384 = vmatprep.subr.bf16.mxu0 0
        %385 = vmatpush1.bf16.msra.mxu0 0
        %386 = vmatprep.mubr.bf16.mxu0 0
        %387 = vmatmul.mubr.bf16.gmra.mrb[0].mxu0 %v331
        %v388 = vpop.f32.mrb[0].mxu0
        %v389 = vadd.f32 0.0, %v388
        %v390 = vpop.f32.mrb[0].mxu0
        %v391 = vadd.f32 0.0, %v390
        %v392 = vpop.f32.mrb[0].mxu0
        %v393 = vadd.f32 0.0, %v392
        %v394 = vpop.f32.mrb[0].mxu0
        %v395 = vadd.f32 0.0, %v394
        %396 = vmatprep.mubr.bf16.mxu0 0
        %397 = vmatmul.mubr.bf16.gmra.mrb[0].mxu0 %v334
        %v398 = vpop.f32.mrb[0].mxu0
        %v399 = vadd.f32 0.0, %v398
        %v400 = vpop.f32.mrb[0].mxu0
        %v401 = vadd.f32 0.0, %v400
        %v402 = vpop.f32.mrb[0].mxu0
        %v403 = vadd.f32 0.0, %v402
        %v404 = vpop.f32.mrb[0].mxu0
        %v405 = vadd.f32 0.0, %v404
        %406 = vmatprep.mubr.bf16.mxu0 0
        %407 = vmatmul.mubr.bf16.gmra.mrb[0].mxu0 %v337
        %v408 = vpop.f32.mrb[0].mxu0
        %v409 = vadd.f32 0.0, %v408
        %v410 = vpop.f32.mrb[0].mxu0
        %v411 = vadd.f32 0.0, %v410
        %v412 = vpop.f32.mrb[0].mxu0
        %v413 = vadd.f32 0.0, %v412
        %v414 = vpop.f32.mrb[0].mxu0
        %v415 = vadd.f32 0.0, %v414
        %416 = vmatprep.mubr.bf16.mxu0 0
        %417 = vmatmul.mubr.bf16.gmra.mrb[0].mxu0 %v340
        %v418 = vpop.f32.mrb[0].mxu0
        %v419 = vadd.f32 0.0, %v418
        %v420 = vpop.f32.mrb[0].mxu0
        %v421 = vadd.f32 0.0, %v420
        %v422 = vpop.f32.mrb[0].mxu0
        %v423 = vadd.f32 0.0, %v422
        %v424 = vpop.f32.mrb[0].mxu0
        %v425 = vadd.f32 0.0, %v424
        %426 = vmatprep.mubr.bf16.mxu0 0
        %427 = vmatmul.mubr.bf16.gmra.mrb[0].mxu0 %v343
        %v428 = vpop.f32.mrb[0].mxu0
        %v429 = vadd.f32 0.0, %v428
        %v430 = vpop.f32.mrb[0].mxu0
        %v431 = vadd.f32 0.0, %v430
        %v432 = vpop.f32.mrb[0].mxu0
        %v433 = vadd.f32 0.0, %v432
        %v434 = vpop.f32.mrb[0].mxu0
        %v435 = vadd.f32 0.0, %v434
        %436 = vmatprep.mubr.bf16.mxu0 0
        %437 = vmatmul.mubr.bf16.gmra.mrb[0].mxu0 %v346
        %v438 = vpop.f32.mrb[0].mxu0
        %v439 = vadd.f32 0.0, %v438
        %v440 = vpop.f32.mrb[0].mxu0
        %v441 = vadd.f32 0.0, %v440
        %v442 = vpop.f32.mrb[0].mxu0
        %v443 = vadd.f32 0.0, %v442
        %v444 = vpop.f32.mrb[0].mxu0
        %v445 = vadd.f32 0.0, %v444
        %446 = vmatprep.mubr.bf16.mxu0 0
        %447 = vmatmul.mubr.bf16.gmra.mrb[0].mxu0 %v349
        %v448 = vpop.f32.mrb[0].mxu0
        %v449 = vadd.f32 0.0, %v448
        %v450 = vpop.f32.mrb[0].mxu0
        %v451 = vadd.f32 0.0, %v450
        %v452 = vpop.f32.mrb[0].mxu0
        %v453 = vadd.f32 0.0, %v452
        %v454 = vpop.f32.mrb[0].mxu0
        %v455 = vadd.f32 0.0, %v454
        %456 = vmatprep.mubr.bf16.mxu0 0
        %457 = vmatmul.mubr.bf16.gmra.mrb[0].mxu0 %v352
        %v458 = vpop.f32.mrb[0].mxu0
        %v459 = vadd.f32 0.0, %v458
        %v460 = vpop.f32.mrb[0].mxu0
        %v461 = vadd.f32 0.0, %v460
        %v462 = vpop.f32.mrb[0].mxu0
        %v463 = vadd.f32 0.0, %v462
        %v464 = vpop.f32.mrb[0].mxu0
        %v465 = vadd.f32 0.0, %v464
        %466 = vdwg.mxu0
        %v467 = vld [vmem:[%s4] sm:$0x1]
        %v469 = vlaneseq
        %v470 = vshrl.u32 %v469, 7
        %v471 = vsub.s32 0, %v470
        %v472 = vrot.slane %v467, %v471
        %v474 = vadd.f32 %v389, %v472
        %v475 = vadd.f32 %v393, %v472
        %v476 = vadd.f32 %v399, %v472
        %v477 = vadd.f32 %v403, %v472
        %v478 = vadd.f32 %v409, %v472
        %v479 = vadd.f32 %v413, %v472
        %v480 = vadd.f32 %v419, %v472
        %v481 = vadd.f32 %v423, %v472
        %v482 = vadd.f32 %v429, %v472
        %v483 = vadd.f32 %v433, %v472
        %v484 = vadd.f32 %v439, %v472
        %v485 = vadd.f32 %v443, %v472
        %v486 = vadd.f32 %v449, %v472
        %v487 = vadd.f32 %v453, %v472
        %v488 = vadd.f32 %v459, %v472
        %v489 = vadd.f32 %v463, %v472
        %vm490 = vcmp.ge.f32.partialorder %v474, 0.0
        %vm491 = vcmp.ge.f32.partialorder %v475, 0.0
        %vm492 = vcmp.ge.f32.partialorder %v476, 0.0
        %vm493 = vcmp.ge.f32.partialorder %v477, 0.0
        %vm494 = vcmp.ge.f32.partialorder %v478, 0.0
        %vm495 = vcmp.ge.f32.partialorder %v479, 0.0
        %vm496 = vcmp.ge.f32.partialorder %v480, 0.0
        %vm497 = vcmp.ge.f32.partialorder %v481, 0.0
        %vm498 = vcmp.ge.f32.partialorder %v482, 0.0
        %vm499 = vcmp.ge.f32.partialorder %v483, 0.0
        %vm500 = vcmp.ge.f32.partialorder %v484, 0.0
        %vm501 = vcmp.ge.f32.partialorder %v485, 0.0
        %vm502 = vcmp.ge.f32.partialorder %v486, 0.0
        %vm503 = vcmp.ge.f32.partialorder %v487, 0.0
        %vm504 = vcmp.ge.f32.partialorder %v488, 0.0
        %vm505 = vcmp.ge.f32.partialorder %v489, 0.0
        %v506 = vmul.f32 %v474, 0.01
        %v507 = vmul.f32 %v475, 0.01
        %v508 = vmul.f32 %v476, 0.01
        %v509 = vmul.f32 %v477, 0.01
        %v510 = vmul.f32 %v478, 0.01
        %v511 = vmul.f32 %v479, 0.01
        %v512 = vmul.f32 %v480, 0.01
        %v513 = vmul.f32 %v481, 0.01
        %v514 = vmul.f32 %v482, 0.01
        %v515 = vmul.f32 %v483, 0.01
        %v516 = vmul.f32 %v484, 0.01
        %v517 = vmul.f32 %v485, 0.01
        %v518 = vmul.f32 %v486, 0.01
        %v519 = vmul.f32 %v487, 0.01
        %v520 = vmul.f32 %v488, 0.01
        %v521 = vmul.f32 %v489, 0.01
        %v522 = vsel %vm490, %v474, %v506
        %v523 = vsel %vm491, %v475, %v507
        %v524 = vsel %vm492, %v476, %v508
        %v525 = vsel %vm493, %v477, %v509
        %v526 = vsel %vm494, %v478, %v510
        %v527 = vsel %vm495, %v479, %v511
        %v528 = vsel %vm496, %v480, %v512
        %v529 = vsel %vm497, %v481, %v513
        %v530 = vsel %vm498, %v482, %v514
        %v531 = vsel %vm499, %v483, %v515
        %v532 = vsel %vm500, %v484, %v516
        %v533 = vsel %vm501, %v485, %v517
        %v534 = vsel %vm502, %v486, %v518
        %v535 = vsel %vm503, %v487, %v519
        %v536 = vsel %vm504, %v488, %v520
        %v537 = vsel %vm505, %v489, %v521
        %v538 = vpack.c.bf16 %v523, %v522
        %v539 = vpack.c.bf16 %v525, %v524
        %v540 = vpack.c.bf16 %v527, %v526
        %v541 = vpack.c.bf16 %v529, %v528
        %v542 = vpack.c.bf16 %v531, %v530
        %v543 = vpack.c.bf16 %v533, %v532
        %v544 = vpack.c.bf16 %v535, %v534
        %v545 = vpack.c.bf16 %v537, %v536
        %v546 = vld [vmem:[%s2] sm:$0xff]
        %v547 = vld [vmem:[%s2 + $0x8] sm:$0xff]
        %v548 = vld [vmem:[%s2 + $0x10] sm:$0xff]
        %v549 = vld [vmem:[%s2 + $0x18] sm:$0xff]
        %v550 = vld [vmem:[%s2 + $0x20] sm:$0xff]
        %v551 = vld [vmem:[%s2 + $0x28] sm:$0xff]
        %v552 = vld [vmem:[%s2 + $0x30] sm:$0xff]
        %v553 = vld [vmem:[%s2 + $0x38] sm:$0xff]
        %v562 = vunpack.c.l.b16 %v546
        %v563 = vunpack.c.h.b16 %v546
        %v564 = vunpack.c.l.b16 %v547
        %v565 = vunpack.c.h.b16 %v547
        %v566 = vunpack.c.l.b16 %v548
        %v567 = vunpack.c.h.b16 %v548
        %v568 = vunpack.c.l.b16 %v549
        %v569 = vunpack.c.h.b16 %v549
        %v570 = vunpack.c.l.b16 %v550
        %v571 = vunpack.c.h.b16 %v550
        %v572 = vunpack.c.l.b16 %v551
        %v573 = vunpack.c.h.b16 %v551
        %v574 = vunpack.c.l.b16 %v552
        %v575 = vunpack.c.h.b16 %v552
        %v576 = vunpack.c.l.b16 %v553
        %v577 = vunpack.c.h.b16 %v553
        %v578 = vpack.c.b16 %v564, %v562
        %v579 = vpack.c.b16 %v565, %v563
        %v580 = vpack.c.b16 %v568, %v566
        %v581 = vpack.c.b16 %v569, %v567
        %v582 = vpack.c.b16 %v572, %v570
        %v583 = vpack.c.b16 %v573, %v571
        %v584 = vpack.c.b16 %v576, %v574
        %v585 = vpack.c.b16 %v577, %v575
        %vm594 = vcmask 523264
        %v596 = vsel %vm594, %v538, 0
        %v599 = vsel %vm594, %v539, 0
        %v602 = vsel %vm594, %v540, 0
        %v605 = vsel %vm594, %v541, 0
        %v608 = vsel %vm594, %v542, 0
        %v611 = vsel %vm594, %v543, 0
        %v614 = vsel %vm594, %v544, 0
        %v617 = vsel %vm594, %v545, 0
        %619 = vmatprep.subr.bf16.mxu0 %v579
        %620 = vmatpush1.bf16.msra.mxu0 %v578
        %621 = vmatprep.subr.bf16.mxu0 %v581
        %622 = vmatpush1.bf16.msra.mxu0 %v580
        %623 = vmatprep.subr.bf16.mxu0 %v583
        %624 = vmatpush1.bf16.msra.mxu0 %v582
        %625 = vmatprep.subr.bf16.mxu0 %v585
        %626 = vmatpush1.bf16.msra.mxu0 %v584
        %627 = vmatprep.subr.bf16.mxu0 0
        %628 = vmatpush1.bf16.msra.mxu0 0
        %629 = vmatprep.subr.bf16.mxu0 0
        %630 = vmatpush1.bf16.msra.mxu0 0
        %631 = vmatprep.subr.bf16.mxu0 0
        %632 = vmatpush1.bf16.msra.mxu0 0
        %633 = vmatprep.subr.bf16.mxu0 0
        %634 = vmatpush1.bf16.msra.mxu0 0
        %635 = vmatprep.subr.bf16.mxu0 0
        %636 = vmatpush1.bf16.msra.mxu0 0
        %637 = vmatprep.subr.bf16.mxu0 0
        %638 = vmatpush1.bf16.msra.mxu0 0
        %639 = vmatprep.subr.bf16.mxu0 0
        %640 = vmatpush1.bf16.msra.mxu0 0
        %641 = vmatprep.subr.bf16.mxu0 0
        %642 = vmatpush1.bf16.msra.mxu0 0
        %643 = vmatprep.subr.bf16.mxu0 0
        %644 = vmatpush1.bf16.msra.mxu0 0
        %645 = vmatprep.subr.bf16.mxu0 0
        %646 = vmatpush1.bf16.msra.mxu0 0
        %647 = vmatprep.subr.bf16.mxu0 0
        %648 = vmatpush1.bf16.msra.mxu0 0
        %649 = vmatprep.subr.bf16.mxu0 0
        %650 = vmatpush1.bf16.msra.mxu0 0
        %651 = vmatprep.mubr.bf16.mxu0 0
        %652 = vmatmul.mubr.bf16.gmra.mrb[0].mxu0 %v596
        %v653 = vpop.f32.mrb[0].mxu0
        %v654 = vadd.f32 0.0, %v653
        %v655 = vpop.f32.mrb[0].mxu0
        %v656 = vadd.f32 0.0, %v655
        %v657 = vpop.f32.mrb[0].mxu0
        %v658 = vadd.f32 0.0, %v657
        %v659 = vpop.f32.mrb[0].mxu0
        %v660 = vadd.f32 0.0, %v659
        %661 = vmatprep.mubr.bf16.mxu0 0
        %662 = vmatmul.mubr.bf16.gmra.mrb[0].mxu0 %v599
        %v663 = vpop.f32.mrb[0].mxu0
        %v664 = vadd.f32 0.0, %v663
        %v665 = vpop.f32.mrb[0].mxu0
        %v666 = vadd.f32 0.0, %v665
        %v667 = vpop.f32.mrb[0].mxu0
        %v668 = vadd.f32 0.0, %v667
        %v669 = vpop.f32.mrb[0].mxu0
        %v670 = vadd.f32 0.0, %v669
        %671 = vmatprep.mubr.bf16.mxu0 0
        %672 = vmatmul.mubr.bf16.gmra.mrb[0].mxu0 %v602
        %v673 = vpop.f32.mrb[0].mxu0
        %v674 = vadd.f32 0.0, %v673
        %v675 = vpop.f32.mrb[0].mxu0
        %v676 = vadd.f32 0.0, %v675
        %v677 = vpop.f32.mrb[0].mxu0
        %v678 = vadd.f32 0.0, %v677
        %v679 = vpop.f32.mrb[0].mxu0
        %v680 = vadd.f32 0.0, %v679
        %681 = vmatprep.mubr.bf16.mxu0 0
        %682 = vmatmul.mubr.bf16.gmra.mrb[0].mxu0 %v605
        %v683 = vpop.f32.mrb[0].mxu0
        %v684 = vadd.f32 0.0, %v683
        %v685 = vpop.f32.mrb[0].mxu0
        %v686 = vadd.f32 0.0, %v685
        %v687 = vpop.f32.mrb[0].mxu0
        %v688 = vadd.f32 0.0, %v687
        %v689 = vpop.f32.mrb[0].mxu0
        %v690 = vadd.f32 0.0, %v689
        %691 = vmatprep.mubr.bf16.mxu0 0
        %692 = vmatmul.mubr.bf16.gmra.mrb[0].mxu0 %v608
        %v693 = vpop.f32.mrb[0].mxu0
        %v694 = vadd.f32 0.0, %v693
        %v695 = vpop.f32.mrb[0].mxu0
        %v696 = vadd.f32 0.0, %v695
        %v697 = vpop.f32.mrb[0].mxu0
        %v698 = vadd.f32 0.0, %v697
        %v699 = vpop.f32.mrb[0].mxu0
        %v700 = vadd.f32 0.0, %v699
        %701 = vmatprep.mubr.bf16.mxu0 0
        %702 = vmatmul.mubr.bf16.gmra.mrb[0].mxu0 %v611
        %v703 = vpop.f32.mrb[0].mxu0
        %v704 = vadd.f32 0.0, %v703
        %v705 = vpop.f32.mrb[0].mxu0
        %v706 = vadd.f32 0.0, %v705
        %v707 = vpop.f32.mrb[0].mxu0
        %v708 = vadd.f32 0.0, %v707
        %v709 = vpop.f32.mrb[0].mxu0
        %v710 = vadd.f32 0.0, %v709
        %711 = vmatprep.mubr.bf16.mxu0 0
        %712 = vmatmul.mubr.bf16.gmra.mrb[0].mxu0 %v614
        %v713 = vpop.f32.mrb[0].mxu0
        %v714 = vadd.f32 0.0, %v713
        %v715 = vpop.f32.mrb[0].mxu0
        %v716 = vadd.f32 0.0, %v715
        %v717 = vpop.f32.mrb[0].mxu0
        %v718 = vadd.f32 0.0, %v717
        %v719 = vpop.f32.mrb[0].mxu0
        %v720 = vadd.f32 0.0, %v719
        %721 = vmatprep.mubr.bf16.mxu0 0
        %722 = vmatmul.mubr.bf16.gmra.mrb[0].mxu0 %v617
        %v723 = vpop.f32.mrb[0].mxu0
        %v724 = vadd.f32 0.0, %v723
        %v725 = vpop.f32.mrb[0].mxu0
        %v726 = vadd.f32 0.0, %v725
        %v727 = vpop.f32.mrb[0].mxu0
        %v728 = vadd.f32 0.0, %v727
        %v729 = vpop.f32.mrb[0].mxu0
        %v730 = vadd.f32 0.0, %v729
        %731 = vdwg.mxu0
        %v732 = vld [vmem:[%s5] sm:$0x1]
        %v734 = vlaneseq
        %v735 = vshrl.u32 %v734, 7
        %v736 = vsub.s32 0, %v735
        %v737 = vrot.slane %v732, %v736
        %v739 = vadd.f32 %v654, %v737
        %v740 = vadd.f32 %v658, %v737
        %v741 = vadd.f32 %v664, %v737
        %v742 = vadd.f32 %v668, %v737
        %v743 = vadd.f32 %v674, %v737
        %v744 = vadd.f32 %v678, %v737
        %v745 = vadd.f32 %v684, %v737
        %v746 = vadd.f32 %v688, %v737
        %v747 = vadd.f32 %v694, %v737
        %v748 = vadd.f32 %v698, %v737
        %v749 = vadd.f32 %v704, %v737
        %v750 = vadd.f32 %v708, %v737
        %v751 = vadd.f32 %v714, %v737
        %v752 = vadd.f32 %v718, %v737
        %v753 = vadd.f32 %v724, %v737
        %v754 = vadd.f32 %v728, %v737
        %771 = vrot.lane.b32.xlu0 %v656, 64
        %v772 = vpop.permute.xlu0 %771
        %773 = vrot.lane.b32.xlu0 %v660, 64
        %v774 = vpop.permute.xlu0 %773
        %775 = vrot.lane.b32.xlu0 %v666, 64
        %v776 = vpop.permute.xlu0 %775
        %777 = vrot.lane.b32.xlu0 %v670, 64
        %v778 = vpop.permute.xlu0 %777
        %779 = vrot.lane.b32.xlu0 %v676, 64
        %v780 = vpop.permute.xlu0 %779
        %781 = vrot.lane.b32.xlu0 %v680, 64
        %v782 = vpop.permute.xlu0 %781
        %783 = vrot.lane.b32.xlu0 %v686, 64
        %v784 = vpop.permute.xlu0 %783
        %785 = vrot.lane.b32.xlu0 %v690, 64
        %v786 = vpop.permute.xlu0 %785
        %787 = vrot.lane.b32.xlu0 %v696, 64
        %v788 = vpop.permute.xlu0 %787
        %789 = vrot.lane.b32.xlu0 %v700, 64
        %v790 = vpop.permute.xlu0 %789
        %791 = vrot.lane.b32.xlu0 %v706, 64
        %v792 = vpop.permute.xlu0 %791
        %793 = vrot.lane.b32.xlu0 %v710, 64
        %v794 = vpop.permute.xlu0 %793
        %795 = vrot.lane.b32.xlu0 %v716, 64
        %v796 = vpop.permute.xlu0 %795
        %797 = vrot.lane.b32.xlu0 %v720, 64
        %v798 = vpop.permute.xlu0 %797
        %799 = vrot.lane.b32.xlu0 %v726, 64
        %v800 = vpop.permute.xlu0 %799
        %801 = vrot.lane.b32.xlu0 %v730, 64
        %v802 = vpop.permute.xlu0 %801
        %v819 = vadd.f32 %v389, %v772
        %v820 = vadd.f32 %v391, %v772
        %v821 = vadd.f32 %v393, %v774
        %v822 = vadd.f32 %v395, %v774
        %v823 = vadd.f32 %v399, %v776
        %v824 = vadd.f32 %v401, %v776
        %v825 = vadd.f32 %v403, %v778
        %v826 = vadd.f32 %v405, %v778
        %v827 = vadd.f32 %v409, %v780
        %v828 = vadd.f32 %v411, %v780
        %v829 = vadd.f32 %v413, %v782
        %v830 = vadd.f32 %v415, %v782
        %v831 = vadd.f32 %v419, %v784
        %v832 = vadd.f32 %v421, %v784
        %v833 = vadd.f32 %v423, %v786
        %v834 = vadd.f32 %v425, %v786
        %v835 = vadd.f32 %v429, %v788
        %v836 = vadd.f32 %v431, %v788
        %v837 = vadd.f32 %v433, %v790
        %v838 = vadd.f32 %v435, %v790
        %v839 = vadd.f32 %v439, %v792
        %v840 = vadd.f32 %v441, %v792
        %v841 = vadd.f32 %v443, %v794
        %v842 = vadd.f32 %v445, %v794
        %v843 = vadd.f32 %v449, %v796
        %v844 = vadd.f32 %v451, %v796
        %v845 = vadd.f32 %v453, %v798
        %v846 = vadd.f32 %v455, %v798
        %v847 = vadd.f32 %v459, %v800
        %v848 = vadd.f32 %v461, %v800
        %v849 = vadd.f32 %v463, %v802
        %v850 = vadd.f32 %v465, %v802
        %vm851 = vcmp.ge.f32.partialorder %v739, 0.0
        %vm852 = vcmp.ge.f32.partialorder %v740, 0.0
        %vm853 = vcmp.ge.f32.partialorder %v741, 0.0
        %vm854 = vcmp.ge.f32.partialorder %v742, 0.0
        %vm855 = vcmp.ge.f32.partialorder %v743, 0.0
        %vm856 = vcmp.ge.f32.partialorder %v744, 0.0
        %vm857 = vcmp.ge.f32.partialorder %v745, 0.0
        %vm858 = vcmp.ge.f32.partialorder %v746, 0.0
        %vm859 = vcmp.ge.f32.partialorder %v747, 0.0
        %vm860 = vcmp.ge.f32.partialorder %v748, 0.0
        %vm861 = vcmp.ge.f32.partialorder %v749, 0.0
        %vm862 = vcmp.ge.f32.partialorder %v750, 0.0
        %vm863 = vcmp.ge.f32.partialorder %v751, 0.0
        %vm864 = vcmp.ge.f32.partialorder %v752, 0.0
        %vm865 = vcmp.ge.f32.partialorder %v753, 0.0
        %vm866 = vcmp.ge.f32.partialorder %v754, 0.0
        %v867 = vmul.f32 %v739, 0.01
        %v868 = vmul.f32 %v740, 0.01
        %v869 = vmul.f32 %v741, 0.01
        %v870 = vmul.f32 %v742, 0.01
        %v871 = vmul.f32 %v743, 0.01
        %v872 = vmul.f32 %v744, 0.01
        %v873 = vmul.f32 %v745, 0.01
        %v874 = vmul.f32 %v746, 0.01
        %v875 = vmul.f32 %v747, 0.01
        %v876 = vmul.f32 %v748, 0.01
        %v877 = vmul.f32 %v749, 0.01
        %v878 = vmul.f32 %v750, 0.01
        %v879 = vmul.f32 %v751, 0.01
        %v880 = vmul.f32 %v752, 0.01
        %v881 = vmul.f32 %v753, 0.01
        %v882 = vmul.f32 %v754, 0.01
        %v883 = vsel %vm851, %v739, %v867
        %v884 = vsel %vm852, %v740, %v868
        %v885 = vsel %vm853, %v741, %v869
        %v886 = vsel %vm854, %v742, %v870
        %v887 = vsel %vm855, %v743, %v871
        %v888 = vsel %vm856, %v744, %v872
        %v889 = vsel %vm857, %v745, %v873
        %v890 = vsel %vm858, %v746, %v874
        %v891 = vsel %vm859, %v747, %v875
        %v892 = vsel %vm860, %v748, %v876
        %v893 = vsel %vm861, %v749, %v877
        %v894 = vsel %vm862, %v750, %v878
        %v895 = vsel %vm863, %v751, %v879
        %v896 = vsel %vm864, %v752, %v880
        %v897 = vsel %vm865, %v753, %v881
        %v898 = vsel %vm866, %v754, %v882
        %v899 = vpack.c.bf16 %v884, %v883
        %v900 = vpack.c.bf16 %v886, %v885
        %v901 = vpack.c.bf16 %v888, %v887
        %v902 = vpack.c.bf16 %v890, %v889
        %v903 = vpack.c.bf16 %v892, %v891
        %v904 = vpack.c.bf16 %v894, %v893
        %v905 = vpack.c.bf16 %v896, %v895
        %v906 = vpack.c.bf16 %v898, %v897
        %v907 = vld [vmem:[%s3] sm:$0xf]
        %v908 = vld [vmem:[%s3 + $0x4] sm:$0xf]
        %v909 = vld [vmem:[%s3 + $0x8] sm:$0xf]
        %v910 = vld [vmem:[%s3 + $0xc] sm:$0xf]
        %v911 = vld [vmem:[%s3 + $0x10] sm:$0xf]
        %v912 = vld [vmem:[%s3 + $0x14] sm:$0xf]
        %v913 = vld [vmem:[%s3 + $0x18] sm:$0xf]
        %v914 = vld [vmem:[%s3 + $0x1c] sm:$0xf]
        %v915 = vld [vmem:[%s3 + $0x20] sm:$0xf]
        %v916 = vld [vmem:[%s3 + $0x24] sm:$0xf]
        %v917 = vld [vmem:[%s3 + $0x28] sm:$0xf]
        %v918 = vld [vmem:[%s3 + $0x2c] sm:$0xf]
        %v919 = vld [vmem:[%s3 + $0x30] sm:$0xf]
        %v920 = vld [vmem:[%s3 + $0x34] sm:$0xf]
        %v921 = vld [vmem:[%s3 + $0x38] sm:$0xf]
        %v922 = vld [vmem:[%s3 + $0x3c] sm:$0xf]
        %v939 = vunpack.c.l.b16 %v907
        %v940 = vunpack.c.l.b16 %v908
        %v941 = vunpack.c.l.b16 %v909
        %v942 = vunpack.c.l.b16 %v910
        %v943 = vunpack.c.l.b16 %v911
        %v944 = vunpack.c.l.b16 %v912
        %v945 = vunpack.c.l.b16 %v913
        %v946 = vunpack.c.l.b16 %v914
        %v947 = vunpack.c.l.b16 %v915
        %v948 = vunpack.c.l.b16 %v916
        %v949 = vunpack.c.l.b16 %v917
        %v950 = vunpack.c.l.b16 %v918
        %v951 = vunpack.c.l.b16 %v919
        %v952 = vunpack.c.l.b16 %v920
        %v953 = vunpack.c.l.b16 %v921
        %v954 = vunpack.c.l.b16 %v922
        %v955 = vpack.c.b16 %v940, %v939
        %v956 = vpack.c.b16 %v942, %v941
        %v957 = vpack.c.b16 %v944, %v943
        %v958 = vpack.c.b16 %v946, %v945
        %v959 = vpack.c.b16 %v948, %v947
        %v960 = vpack.c.b16 %v950, %v949
        %v961 = vpack.c.b16 %v952, %v951
        %v962 = vpack.c.b16 %v954, %v953
        %971 = vmatprep.subr.bf16.mxu0 0
        %972 = vmatpush1.bf16.msra.mxu0 %v955
        %973 = vmatprep.subr.bf16.mxu0 0
        %974 = vmatpush1.bf16.msra.mxu0 %v956
        %975 = vmatprep.subr.bf16.mxu0 0
        %976 = vmatpush1.bf16.msra.mxu0 %v957
        %977 = vmatprep.subr.bf16.mxu0 0
        %978 = vmatpush1.bf16.msra.mxu0 %v958
        %979 = vmatprep.subr.bf16.mxu0 0
        %980 = vmatpush1.bf16.msra.mxu0 %v959
        %981 = vmatprep.subr.bf16.mxu0 0
        %982 = vmatpush1.bf16.msra.mxu0 %v960
        %983 = vmatprep.subr.bf16.mxu0 0
        %984 = vmatpush1.bf16.msra.mxu0 %v961
        %985 = vmatprep.subr.bf16.mxu0 0
        %986 = vmatpush1.bf16.msra.mxu0 %v962
        %987 = vmatprep.subr.bf16.mxu0 0
        %988 = vmatpush1.bf16.msra.mxu0 0
        %989 = vmatprep.subr.bf16.mxu0 0
        %990 = vmatpush1.bf16.msra.mxu0 0
        %991 = vmatprep.subr.bf16.mxu0 0
        %992 = vmatpush1.bf16.msra.mxu0 0
        %993 = vmatprep.subr.bf16.mxu0 0
        %994 = vmatpush1.bf16.msra.mxu0 0
        %995 = vmatprep.subr.bf16.mxu0 0
        %996 = vmatpush1.bf16.msra.mxu0 0
        %997 = vmatprep.subr.bf16.mxu0 0
        %998 = vmatpush1.bf16.msra.mxu0 0
        %999 = vmatprep.subr.bf16.mxu0 0
        %1000 = vmatpush1.bf16.msra.mxu0 0
        %1001 = vmatprep.subr.bf16.mxu0 0
        %1002 = vmatpush1.bf16.msra.mxu0 0
        %1003 = vmatprep.mubr.bf16.mxu0 0
        %1004 = vmatmul.mubr.bf16.gmra.mrb[0].mxu0 %v899
        %v1005 = vpop.f32.mrb[0].mxu0
        %v1006 = vadd.f32 0.0, %v1005
        %v1007 = vpop.f32.mrb[0].mxu0
        %v1008 = vpop.f32.mrb[0].mxu0
        %v1009 = vadd.f32 0.0, %v1008
        %v1010 = vpop.f32.mrb[0].mxu0
        %1011 = vmatprep.mubr.bf16.mxu0 0
        %1012 = vmatmul.mubr.bf16.gmra.mrb[0].mxu0 %v900
        %v1013 = vpop.f32.mrb[0].mxu0
        %v1014 = vadd.f32 0.0, %v1013
        %v1015 = vpop.f32.mrb[0].mxu0
        %v1016 = vpop.f32.mrb[0].mxu0
        %v1017 = vadd.f32 0.0, %v1016
        %v1018 = vpop.f32.mrb[0].mxu0
        %1019 = vmatprep.mubr.bf16.mxu0 0
        %1020 = vmatmul.mubr.bf16.gmra.mrb[0].mxu0 %v901
        %v1021 = vpop.f32.mrb[0].mxu0
        %v1022 = vadd.f32 0.0, %v1021
        %v1023 = vpop.f32.mrb[0].mxu0
        %v1024 = vpop.f32.mrb[0].mxu0
        %v1025 = vadd.f32 0.0, %v1024
        %v1026 = vpop.f32.mrb[0].mxu0
        %1027 = vmatprep.mubr.bf16.mxu0 0
        %1028 = vmatmul.mubr.bf16.gmra.mrb[0].mxu0 %v902
        %v1029 = vpop.f32.mrb[0].mxu0
        %v1030 = vadd.f32 0.0, %v1029
        %v1031 = vpop.f32.mrb[0].mxu0
        %v1032 = vpop.f32.mrb[0].mxu0
        %v1033 = vadd.f32 0.0, %v1032
        %v1034 = vpop.f32.mrb[0].mxu0
        %1035 = vmatprep.mubr.bf16.mxu0 0
        %1036 = vmatmul.mubr.bf16.gmra.mrb[0].mxu0 %v903
        %v1037 = vpop.f32.mrb[0].mxu0
        %v1038 = vadd.f32 0.0, %v1037
        %v1039 = vpop.f32.mrb[0].mxu0
        %v1040 = vpop.f32.mrb[0].mxu0
        %v1041 = vadd.f32 0.0, %v1040
        %v1042 = vpop.f32.mrb[0].mxu0
        %1043 = vmatprep.mubr.bf16.mxu0 0
        %1044 = vmatmul.mubr.bf16.gmra.mrb[0].mxu0 %v904
        %v1045 = vpop.f32.mrb[0].mxu0
        %v1046 = vadd.f32 0.0, %v1045
        %v1047 = vpop.f32.mrb[0].mxu0
        %v1048 = vpop.f32.mrb[0].mxu0
        %v1049 = vadd.f32 0.0, %v1048
        %v1050 = vpop.f32.mrb[0].mxu0
        %1051 = vmatprep.mubr.bf16.mxu0 0
        %1052 = vmatmul.mubr.bf16.gmra.mrb[0].mxu0 %v905
        %v1053 = vpop.f32.mrb[0].mxu0
        %v1054 = vadd.f32 0.0, %v1053
        %v1055 = vpop.f32.mrb[0].mxu0
        %v1056 = vpop.f32.mrb[0].mxu0
        %v1057 = vadd.f32 0.0, %v1056
        %v1058 = vpop.f32.mrb[0].mxu0
        %1059 = vmatprep.mubr.bf16.mxu0 0
        %1060 = vmatmul.mubr.bf16.gmra.mrb[0].mxu0 %v906
        %v1061 = vpop.f32.mrb[0].mxu0
        %v1062 = vadd.f32 0.0, %v1061
        %v1063 = vpop.f32.mrb[0].mxu0
        %v1064 = vpop.f32.mrb[0].mxu0
        %v1065 = vadd.f32 0.0, %v1064
        %v1066 = vpop.f32.mrb[0].mxu0
        %1067 = vdwg.mxu0
        %1084 = vrot.lane.b32.xlu0 %v1006, 64
        %v1085 = vpop.permute.xlu0 %1084
        %1086 = vrot.lane.b32.xlu0 %v1009, 64
        %v1087 = vpop.permute.xlu0 %1086
        %1088 = vrot.lane.b32.xlu0 %v1014, 64
        %v1089 = vpop.permute.xlu0 %1088
        %1090 = vrot.lane.b32.xlu0 %v1017, 64
        %v1091 = vpop.permute.xlu0 %1090
        %1092 = vrot.lane.b32.xlu0 %v1022, 64
        %v1093 = vpop.permute.xlu0 %1092
        %1094 = vrot.lane.b32.xlu0 %v1025, 64
        %v1095 = vpop.permute.xlu0 %1094
        %1096 = vrot.lane.b32.xlu0 %v1030, 64
        %v1097 = vpop.permute.xlu0 %1096
        %1098 = vrot.lane.b32.xlu0 %v1033, 64
        %v1099 = vpop.permute.xlu0 %1098
        %1100 = vrot.lane.b32.xlu0 %v1038, 64
        %v1101 = vpop.permute.xlu0 %1100
        %1102 = vrot.lane.b32.xlu0 %v1041, 64
        %v1103 = vpop.permute.xlu0 %1102
        %1104 = vrot.lane.b32.xlu0 %v1046, 64
        %v1105 = vpop.permute.xlu0 %1104
        %1106 = vrot.lane.b32.xlu0 %v1049, 64
        %v1107 = vpop.permute.xlu0 %1106
        %1108 = vrot.lane.b32.xlu0 %v1054, 64
        %v1109 = vpop.permute.xlu0 %1108
        %1110 = vrot.lane.b32.xlu0 %v1057, 64
        %v1111 = vpop.permute.xlu0 %1110
        %1112 = vrot.lane.b32.xlu0 %v1062, 64
        %v1113 = vpop.permute.xlu0 %1112
        %1114 = vrot.lane.b32.xlu0 %v1065, 64
        %v1115 = vpop.permute.xlu0 %1114
        %v1132 = vadd.f32 %v819, %v1085
        %v1133 = vadd.f32 %v820, %v1085
        %v1134 = vadd.f32 %v821, %v1087
        %v1135 = vadd.f32 %v822, %v1087
        %v1136 = vadd.f32 %v823, %v1089
        %v1137 = vadd.f32 %v824, %v1089
        %v1138 = vadd.f32 %v825, %v1091
        %v1139 = vadd.f32 %v826, %v1091
        %v1140 = vadd.f32 %v827, %v1093
        %v1141 = vadd.f32 %v828, %v1093
        %v1142 = vadd.f32 %v829, %v1095
        %v1143 = vadd.f32 %v830, %v1095
        %v1144 = vadd.f32 %v831, %v1097
        %v1145 = vadd.f32 %v832, %v1097
        %v1146 = vadd.f32 %v833, %v1099
        %v1147 = vadd.f32 %v834, %v1099
        %v1148 = vadd.f32 %v835, %v1101
        %v1149 = vadd.f32 %v836, %v1101
        %v1150 = vadd.f32 %v837, %v1103
        %v1151 = vadd.f32 %v838, %v1103
        %v1152 = vadd.f32 %v839, %v1105
        %v1153 = vadd.f32 %v840, %v1105
        %v1154 = vadd.f32 %v841, %v1107
        %v1155 = vadd.f32 %v842, %v1107
        %v1156 = vadd.f32 %v843, %v1109
        %v1157 = vadd.f32 %v844, %v1109
        %v1158 = vadd.f32 %v845, %v1111
        %v1159 = vadd.f32 %v846, %v1111
        %v1160 = vadd.f32 %v847, %v1113
        %v1161 = vadd.f32 %v848, %v1113
        %v1162 = vadd.f32 %v849, %v1115
        %v1163 = vadd.f32 %v850, %v1115
        %v1164 = vld [vmem:[%s6] sm:$0x1]
        %v1166 = vlaneseq
        %v1167 = vshrl.u32 %v1166, 7
        %v1168 = vsub.s32 0, %v1167
        %v1169 = vrot.slane %v1164, %v1168
        %1170 = vrot.lane.b32.xlu0 %v1169, 64
        %v1171 = vpop.permute.xlu0 %1170
        %v1173 = vadd.f32 %v1132, %v1171
        %v1174 = vadd.f32 %v1133, %v1171
        %v1175 = vadd.f32 %v1134, %v1171
        %v1176 = vadd.f32 %v1135, %v1171
        %v1177 = vadd.f32 %v1136, %v1171
        %v1178 = vadd.f32 %v1137, %v1171
        %v1179 = vadd.f32 %v1138, %v1171
        %v1180 = vadd.f32 %v1139, %v1171
        %v1181 = vadd.f32 %v1140, %v1171
        %v1182 = vadd.f32 %v1141, %v1171
        %v1183 = vadd.f32 %v1142, %v1171
        %v1184 = vadd.f32 %v1143, %v1171
        %v1185 = vadd.f32 %v1144, %v1171
        %v1186 = vadd.f32 %v1145, %v1171
        %v1187 = vadd.f32 %v1146, %v1171
        %v1188 = vadd.f32 %v1147, %v1171
        %v1189 = vadd.f32 %v1148, %v1171
        %v1190 = vadd.f32 %v1149, %v1171
        %v1191 = vadd.f32 %v1150, %v1171
        %v1192 = vadd.f32 %v1151, %v1171
        %v1193 = vadd.f32 %v1152, %v1171
        %v1194 = vadd.f32 %v1153, %v1171
        %v1195 = vadd.f32 %v1154, %v1171
        %v1196 = vadd.f32 %v1155, %v1171
        %v1197 = vadd.f32 %v1156, %v1171
        %v1198 = vadd.f32 %v1157, %v1171
        %v1199 = vadd.f32 %v1158, %v1171
        %v1200 = vadd.f32 %v1159, %v1171
        %v1201 = vadd.f32 %v1160, %v1171
        %v1202 = vadd.f32 %v1161, %v1171
        %v1203 = vadd.f32 %v1162, %v1171
        %v1204 = vadd.f32 %v1163, %v1171
        %1237 = vrot.lane.b32.xlu0 %v1173, 64
        %v1238 = vpop.permute.xlu0 %1237
        %1239 = vrot.lane.b32.xlu0 %v1174, 64
        %v1240 = vpop.permute.xlu0 %1239
        %1241 = vrot.lane.b32.xlu0 %v1175, 64
        %v1242 = vpop.permute.xlu0 %1241
        %1243 = vrot.lane.b32.xlu0 %v1176, 64
        %v1244 = vpop.permute.xlu0 %1243
        %1245 = vrot.lane.b32.xlu0 %v1177, 64
        %v1246 = vpop.permute.xlu0 %1245
        %1247 = vrot.lane.b32.xlu0 %v1178, 64
        %v1248 = vpop.permute.xlu0 %1247
        %1249 = vrot.lane.b32.xlu0 %v1179, 64
        %v1250 = vpop.permute.xlu0 %1249
        %1251 = vrot.lane.b32.xlu0 %v1180, 64
        %v1252 = vpop.permute.xlu0 %1251
        %1253 = vrot.lane.b32.xlu0 %v1181, 64
        %v1254 = vpop.permute.xlu0 %1253
        %1255 = vrot.lane.b32.xlu0 %v1182, 64
        %v1256 = vpop.permute.xlu0 %1255
        %1257 = vrot.lane.b32.xlu0 %v1183, 64
        %v1258 = vpop.permute.xlu0 %1257
        %1259 = vrot.lane.b32.xlu0 %v1184, 64
        %v1260 = vpop.permute.xlu0 %1259
        %1261 = vrot.lane.b32.xlu0 %v1185, 64
        %v1262 = vpop.permute.xlu0 %1261
        %1263 = vrot.lane.b32.xlu0 %v1186, 64
        %v1264 = vpop.permute.xlu0 %1263
        %1265 = vrot.lane.b32.xlu0 %v1187, 64
        %v1266 = vpop.permute.xlu0 %1265
        %1267 = vrot.lane.b32.xlu0 %v1188, 64
        %v1268 = vpop.permute.xlu0 %1267
        %1269 = vrot.lane.b32.xlu0 %v1189, 64
        %v1270 = vpop.permute.xlu0 %1269
        %1271 = vrot.lane.b32.xlu0 %v1190, 64
        %v1272 = vpop.permute.xlu0 %1271
        %1273 = vrot.lane.b32.xlu0 %v1191, 64
        %v1274 = vpop.permute.xlu0 %1273
        %1275 = vrot.lane.b32.xlu0 %v1192, 64
        %v1276 = vpop.permute.xlu0 %1275
        %1277 = vrot.lane.b32.xlu0 %v1193, 64
        %v1278 = vpop.permute.xlu0 %1277
        %1279 = vrot.lane.b32.xlu0 %v1194, 64
        %v1280 = vpop.permute.xlu0 %1279
        %1281 = vrot.lane.b32.xlu0 %v1195, 64
        %v1282 = vpop.permute.xlu0 %1281
        %1283 = vrot.lane.b32.xlu0 %v1196, 64
        %v1284 = vpop.permute.xlu0 %1283
        %1285 = vrot.lane.b32.xlu0 %v1197, 64
        %v1286 = vpop.permute.xlu0 %1285
        %1287 = vrot.lane.b32.xlu0 %v1198, 64
        %v1288 = vpop.permute.xlu0 %1287
        %1289 = vrot.lane.b32.xlu0 %v1199, 64
        %v1290 = vpop.permute.xlu0 %1289
        %1291 = vrot.lane.b32.xlu0 %v1200, 64
        %v1292 = vpop.permute.xlu0 %1291
        %1293 = vrot.lane.b32.xlu0 %v1201, 64
        %v1294 = vpop.permute.xlu0 %1293
        %1295 = vrot.lane.b32.xlu0 %v1202, 64
        %v1296 = vpop.permute.xlu0 %1295
        %1297 = vrot.lane.b32.xlu0 %v1203, 64
        %v1298 = vpop.permute.xlu0 %1297
        %1299 = vrot.lane.b32.xlu0 %v1204, 64
        %v1300 = vpop.permute.xlu0 %1299
        %v1301 = vsel %vm594, %v1238, %v1240
        %v1302 = vsel %vm594, %v1242, %v1244
        %v1303 = vsel %vm594, %v1246, %v1248
        %v1304 = vsel %vm594, %v1250, %v1252
        %v1305 = vsel %vm594, %v1254, %v1256
        %v1306 = vsel %vm594, %v1258, %v1260
        %v1307 = vsel %vm594, %v1262, %v1264
        %v1308 = vsel %vm594, %v1266, %v1268
        %v1309 = vsel %vm594, %v1270, %v1272
        %v1310 = vsel %vm594, %v1274, %v1276
        %v1311 = vsel %vm594, %v1278, %v1280
        %v1312 = vsel %vm594, %v1282, %v1284
        %v1313 = vsel %vm594, %v1286, %v1288
        %v1314 = vsel %vm594, %v1290, %v1292
        %v1315 = vsel %vm594, %v1294, %v1296
        %v1316 = vsel %vm594, %v1298, %v1300
        %1333 = vst [vmem:[%s272] sm:$0xff] %v1301
        %1334 = vst [vmem:[%s272 + $0x8] sm:$0xff] %v1302
        %1335 = vst [vmem:[%s272 + $0x10] sm:$0xff] %v1303
        %1336 = vst [vmem:[%s272 + $0x18] sm:$0xff] %v1304
        %1337 = vst [vmem:[%s272 + $0x20] sm:$0xff] %v1305
        %1338 = vst [vmem:[%s272 + $0x28] sm:$0xff] %v1306
        %1339 = vst [vmem:[%s272 + $0x30] sm:$0xff] %v1307
        %1340 = vst [vmem:[%s272 + $0x38] sm:$0xff] %v1308
        %1341 = vst [vmem:[%s272 + $0x40] sm:$0xff] %v1309
        %1342 = vst [vmem:[%s272 + $0x48] sm:$0xff] %v1310
        %1343 = vst [vmem:[%s272 + $0x50] sm:$0xff] %v1311
        %1344 = vst [vmem:[%s272 + $0x58] sm:$0xff] %v1312
        %1345 = vst [vmem:[%s272 + $0x60] sm:$0xff] %v1313
        %1346 = vst [vmem:[%s272 + $0x68] sm:$0xff] %v1314
        %1347 = vst [vmem:[%s272 + $0x70] sm:$0xff] %v1315
        %1348 = vst [vmem:[%s272 + $0x78] sm:$0xff] %v1316
        %s1349 = sand.u32 %s181, 1
        %s1350 = scalar_lea.sflag [#allocation3], %s1349
        %s1351 = sand.u32 %s181, 1
        %s1352 = smul.addr %s1351, 128
        %s1353 = scalar_lea.vmem [#allocation2], %s1352
        // Predicated region
        $region49: #{tpu_custom_call.1} parent=47 // pred_check
          %p1354 = pneg %p191
        $region50: #{tpu_custom_call.1} parent=47 // pred_check_branch
          %1356 = sbr.rel (%p1354) target = $region52
        $region51: #{tpu_custom_call.1} parent=47 // pred_region
          %s1357 = smul.u32 16, %s21
          %s1359 = ssub.s32 2048, 2048
          %1360 = vsyncadd %s1350, %s1359
          %s1361 = smul.addr %s1357, 128
          %s1362 = scalar_lea.hbm %s7, %s1361
          %s1363 = sshll.u32 %s1353, 4
          %s1364 = int_to_ptr.vmem [resolvable:$true] %s1363
          %1369 = dma.vmem_to_hbm [thread:$0]  %s1364, 2048, %s1362, %s1350, 128, 128, 8
        $region52: #{tpu_custom_call.1} parent=47 // pred_fallthru
          _
      $region48: #{tpu_custom_call.1} parent=5 // pred_fallthru
        _
      %p1370 = scmp.le.s32.totalorder 2, %s16
      // Predicated region
      $region53: #{tpu_custom_call.1} parent=5 // pred_check
        %p1371 = pneg %p1370
      $region54: #{tpu_custom_call.1} parent=5 // pred_check_branch
        %1373 = sbr.rel (%p1371) target = $region56
      $region55: #{tpu_custom_call.1} parent=5 // pred_region
        %s1374 = ssub.s32 %s16, 2
        // Predicated region
        $region57: #{tpu_custom_call.1} parent=55 // pred_check
          %p1375 = pneg %p197
        $region58: #{tpu_custom_call.1} parent=55 // pred_check_branch
          %1377 = sbr.rel (%p1375) target = $region60
        $region59: #{tpu_custom_call.1} parent=55 // pred_region
          %s1378 = sand.u32 %s182, 1
          %s1379 = scalar_lea.sflag [#allocation3], %s1378
          %s1380 = sand.u32 %s182, 1
          %s1381 = smul.addr %s1380, 128
          %s1382 = scalar_lea.vmem [#allocation2], %s1381
          %1383 = dma.done %s1379, 2048
        $region60: #{tpu_custom_call.1} parent=55 // pred_fallthru
          _
      $region56: #{tpu_custom_call.1} parent=5 // pred_fallthru
        _
    $region6: #{tpu_custom_call.1} parent=1 // loop_footer
      %s20 = sadd.s32 1, %s16
    $region7: #{tpu_custom_call.1} parent=1 // loop_footer_branch
      %15 = sbr.rel target = $region3
    $region8: #{tpu_custom_call.1} parent=1 // loop_exit
      _
    %1384 = vsyncpa [#allocation3], 1
    %s1385 = scalar_lea.sflag [#allocation3], 1
    %1386 = vsyncpa %s1385, 1

</llo_original>
